<compile_context>
chip_gen: v6e
topology: v6e:2x2x1
jax: 0.10.0
libtpu: 0.0.40
codegen_flags: <defaults>
</compile_context>

<pallas_src>
import math

import numpy as np
import jax
import jax.numpy as jnp
from jax.experimental import pallas as pl
from jax.experimental.pallas import tpu as pltpu


DEFAULT_ANCHORS = [
    [[10, 13], [16, 30], [33, 23]],
    [[30, 61], [62, 45], [59, 119]],
    [[116, 90], [156, 198], [373, 326]],
]


# -----------------------------------------------------------------------------
# Fused kernel: 1x1 conv (transposed-LHS MXU matmul) + bias + YOLO decode epilogue,
# with anchor-major stores (no post-kernel transpose needed).
# -----------------------------------------------------------------------------
def head_fused_kernel(x_ref, w_ref, b_ref, dtab_ref, g_ref, raw_ref, det_ref):
    # x_ref   : (C, tm)  f32   NCHW slab, pixels along lanes (no wrapper transpose/cast)
    # w_ref   : (C, N)   bf16  resident 1x1-conv weights
    # b_ref   : (1, N)   f32   bias
    # dtab_ref: (8, N)   f32   per-column decode constants (rows: lin,quad,selx,sely,add)
    # g_ref   : (tm, 2)  f32   per-pixel (gx, gy)
    # raw_ref : (A, tm, no) bf16   raw head output (training path), anchor-major
    # det_ref : (A, tm, no) f32    decoded detections, anchor-major
    x = x_ref[...].astype(jnp.bfloat16)
    y = jax.lax.dot_general(
        x, w_ref[...],
        dimension_numbers=(((0,), (0,)), ((), ())),        # contract LHS dim 0 (C)
        preferred_element_type=jnp.float32)                # (tm, N), f32 accumulate
    y = y + b_ref[...]

    # Decode: det = s*(lin + s*quad) + (gx*selx + gy*sely + add)
    #   xy cols : (2s - 0.5 + grid) * stride
    #   wh cols : (2s)^2 * anchor * stride
    #   rest    : s
    s = jax.nn.sigmoid(y)
    lin = dtab_ref[0:1, :]
    quad = dtab_ref[1:2, :]
    selx = dtab_ref[2:3, :]
    sely = dtab_ref[3:4, :]
    add = dtab_ref[4:5, :]
    gx = g_ref[:, 0:1]
    gy = g_ref[:, 1:2]
    det = s * (lin + s * quad) + (gx * selx + gy * sely + add)

    A, _, no = raw_ref.shape
    for a in range(A):                                      # static unroll (A == 3)
        lo = a * no
        raw_ref[a, :, :] = y[:, lo:lo + no].astype(raw_ref.dtype)
        det_ref[a, :, :] = det[:, lo:lo + no]


def _choose_tm(hw, target=2048):
    """Pick a pixel-tile that exactly divides hw; multiple of 128 when tiling."""
    if hw <= target:
        return hw
    best = hw
    t = 128
    while t <= target:
        if hw % t == 0:
            best = t
        t += 128
    return best


# -----------------------------------------------------------------------------
# Per-level wrapper.
# -----------------------------------------------------------------------------
def detection_head_level(fmap, w, b, level_anchors, stride, num_anchors, num_outputs):
    """One detection level: fused 1x1 conv + decode.

    Returns:
      raw: (B, A, H, W, no)   bf16 -- matches torch DetectionHead.forward output layout
      det: (B, A*H*W, no)     f32  -- decoded detections for this level
    """
    B, C, H, W = fmap.shape
    A, no = num_anchors, num_outputs
    N = A * no
    HW = H * W
    tm = _choose_tm(HW)
    n_tiles = HW // tm

    x3 = fmap.reshape(B, C, HW)                      # free view of NCHW, no copy
    w_bf = w.astype(jnp.bfloat16)                    # (C, N), tiny
    b2 = jnp.reshape(b, (1, N)).astype(jnp.float32)

    # Per-column decode constants (host-built, tiny).
    s_ = float(stride)
    dtab = np.zeros((8, N), np.float32)
    for a in range(A):
        base = a * no
        dtab[0, base + 0] = dtab[0, base + 1] = 2.0 * s_            # lin (xy)
        dtab[0, base + 4:base + no] = 1.0                            # lin (obj/cls)
        dtab[1, base + 2] = 4.0 * float(level_anchors[a][0]) * s_    # quad (w)
        dtab[1, base + 3] = 4.0 * float(level_anchors[a][1]) * s_    # quad (h)
        dtab[2, base + 0] = s_                                       # selx
        dtab[3, base + 1] = s_                                       # sely
        dtab[4, base + 0] = dtab[4, base + 1] = -0.5 * s_            # add (xy)
    dtab = jnp.asarray(dtab)

    # Per-pixel (gx, gy), rows ordered h*W + w (same as NCHW pixel flattening).
    gy_, gx_ = np.meshgrid(np.arange(H), np.arange(W), indexing="ij")
    g_rows = jnp.asarray(np.stack([gx_, gy_], axis=-1)
                         .reshape(HW, 2).astype(np.float32))

    flops = 2 * B * HW * C * N
    bytes_accessed = (B * C * HW * 4                 # f32 activations (single pass)
                      + C * N * 2                    # bf16 weights
                      + 9 * N * 4 + HW * 2 * 4       # bias + decode + grid tables
                      + B * A * HW * no * (2 + 4))   # bf16 raw + f32 det outputs

    raw4, det4 = pl.pallas_call(
        head_fused_kernel,
        out_shape=(jax.ShapeDtypeStruct((B, A, HW, no), jnp.bfloat16),
                   jax.ShapeDtypeStruct((B, A, HW, no), jnp.float32)),
        grid_spec=pltpu.PrefetchScalarGridSpec(
            num_scalar_prefetch=0,
            grid=(B, n_tiles),
            in_specs=[
                pl.BlockSpec((pl.Squeezed(), C, tm), lambda bb, i: (bb, 0, i)),   # activations
                pl.BlockSpec((C, N), lambda bb, i: (0, 0)),                        # weights (resident)
                pl.BlockSpec((1, N), lambda bb, i: (0, 0)),                        # bias (resident)
                pl.BlockSpec((8, N), lambda bb, i: (0, 0)),                        # decode constants
                pl.BlockSpec((tm, 2), lambda bb, i: (i, 0)),                       # per-pixel grid xy
            ],
            out_specs=[
                pl.BlockSpec((pl.Squeezed(), A, tm, no), lambda bb, i: (bb, 0, i, 0)),  # raw (bf16)
                pl.BlockSpec((pl.Squeezed(), A, tm, no), lambda bb, i: (bb, 0, i, 0)),  # det (f32)
            ],
        ),
        compiler_params=pltpu.CompilerParams(
            dimension_semantics=("parallel", "parallel"),   # batch x pixel tiles independent
            vmem_limit_bytes=32 * 1024 * 1024,              # within v7x 64 MiB physical
        ),
        cost_estimate=pl.CostEstimate(
            flops=flops,
            transcendentals=B * HW * N,
            bytes_accessed=bytes_accessed,
        ),
    )(x3, w_bf, b2, dtab, g_rows)

    # Anchor-major kernel output -> torch layouts are free reshapes (no HBM transpose).
    raw = raw4.reshape(B, A, H, W, no)
    det = det4.reshape(B, A * HW, no)
    return raw, det


# -----------------------------------------------------------------------------
# DetectionHead params + SkyEyeDetector forward glue.
# -----------------------------------------------------------------------------
def init_detection_head(key, channels, num_classes, num_anchors):
    """Conv2d(ch, A*(nc+5), 1) per level; normal(0, sqrt(2/n)) weights, zero bias."""
    no = num_classes + 5
    cout = num_anchors * no
    params = []
    for i, ch in enumerate(channels):
        k = jax.random.fold_in(key, i)
        std = math.sqrt(2.0 / (1 * 1 * cout))
        w = jax.random.normal(k, (ch, cout), jnp.float32) * std   # stored (C_in, C_out)
        b = jnp.zeros((1, cout), jnp.float32)
        params.append((w, b))
    return params


def skyeye_detector_forward(params, feature_maps, anchors, input_shape,
                            num_anchors, num_outputs):
    # TODO(synk): backbone + FeatureNeck forward omitted (building blocks undefined in the
    # provided source); feature_maps stand in for the neck outputs feeding the head.
    outputs, dets = [], []
    for lvl, ((w, b), fmap) in enumerate(zip(params, feature_maps)):
        H, W = fmap.shape[2], fmap.shape[3]
        stride = max(input_shape[0] / H, input_shape[1] / W)
        raw, det = detection_head_level(fmap, w, b, anchors[lvl], stride,
                                        num_anchors, num_outputs)
        outputs.append(raw)
        dets.append(det)
    detections = jnp.concatenate(dets, axis=1)
    return detections, outputs


# -----------------------------------------------------------------------------
# Pure-JAX reference (same bf16 matmul inputs) for correctness checking.
# -----------------------------------------------------------------------------
def _reference_forward(params, feature_maps, anchors, input_shape,
                       num_anchors, num_outputs):
    A, no = num_anchors, num_outputs
    outs, dets = [], []
    for lvl, ((w, b), fmap) in enumerate(zip(params, feature_maps)):
        B, C, H, W = fmap.shape
        stride = max(input_shape[0] / H, input_shape[1] / W)
        x2d = jnp.transpose(fmap, (0, 2, 3, 1)).reshape(-1, C).astype(jnp.bfloat16)
        y = jnp.dot(x2d, w.astype(jnp.bfloat16),
                    preferred_element_type=jnp.float32) + b
        y = jnp.transpose(y.reshape(B, H, W, A, no), (0, 3, 1, 2, 4))
        outs.append(y)
        s = jax.nn.sigmoid(y)
        yv, xv = jnp.meshgrid(jnp.arange(H), jnp.arange(W), indexing="ij")
        grid = jnp.stack([xv, yv], -1).astype(jnp.float32)
        anc = jnp.asarray(anchors[lvl], jnp.float32) * stride
        xy = (s[..., 0:2] * 2.0 - 0.5 + grid[None, None]) * stride
        wh = (s[..., 2:4] * 2.0) ** 2 * anc[None, :, None, None, :]
        d = jnp.concatenate([xy, wh, s[..., 4:]], axis=-1).reshape(B, -1, no)
        dets.append(d)
    return jnp.concatenate(dets, 1), outs


# -----------------------------------------------------------------------------
# main
# -----------------------------------------------------------------------------
if __name__ == "__main__":
    key = jax.random.PRNGKey(0)

    batch = 2
    num_classes = 3
    num_anchors = 3
    num_outputs = num_classes + 5
    channels = [32, 64, 128]             # neck out_channels (small synthetic)
    grids = [(8, 8), (4, 4), (2, 2)]     # P3/P4/P5 spatial sizes
    input_shape = (64, 64)               # image (h, w) -> strides 8, 16, 32

    k_feat, k_param = jax.random.split(key)
    feature_maps = []
    for i, (ch, (h, w)) in enumerate(zip(channels, grids)):
        kf = jax.random.fold_in(k_feat, i)
        feature_maps.append(jax.random.normal(kf, (batch, ch, h, w), jnp.float32))

    params = init_detection_head(k_param, channels, num_classes, num_anchors)

    detections, outputs = skyeye_detector_forward(
        params, feature_maps, DEFAULT_ANCHORS, input_shape,
        num_anchors, num_outputs)

    detections = jax.block_until_ready(detections)
    outputs = [jax.block_until_ready(o) for o in outputs]

    # shape sanity (matches the torch semantics)
    assert detections.shape == (batch, sum(num_anchors * h * w for h, w in grids),
                                num_outputs)
    for o, (h, w) in zip(outputs, grids):
        assert o.shape == (batch, num_anchors, h, w, num_outputs)

    # numeric check against a pure-JAX reference (same bf16 matmul inputs; raw head
    # output is intentionally stored bf16 -> covered by the tolerance below)
    ref_det, ref_outs = _reference_forward(
        params, feature_maps, DEFAULT_ANCHORS, input_shape,
        num_anchors, num_outputs)
    for o, ro in zip(outputs, ref_outs):
        np.testing.assert_allclose(np.asarray(o, dtype=np.float32), np.asarray(ro),
                                   rtol=2e-2, atol=2e-2)
    np.testing.assert_allclose(np.asarray(detections), np.asarray(ref_det),
                               rtol=2e-2, atol=2e-2)

    print("KERNEL_OK")
</pallas_src>

<mosaic_0001>
module attributes {stable_mosaic.version = 11 : i64} {
  func.func @head_fused_kernel(%arg0: i32, %arg1: i32, %arg2: memref<1x32x64xf32, #tpu.memory_space<vmem>>, %arg3: memref<32x24xbf16, #tpu.memory_space<vmem>>, %arg4: memref<1x24xf32, #tpu.memory_space<vmem>>, %arg5: memref<8x24xf32, #tpu.memory_space<vmem>>, %arg6: memref<64x2xf32, #tpu.memory_space<vmem>>, %arg7: memref<1x3x64x8xbf16, #tpu.memory_space<vmem>>, %arg8: memref<1x3x64x8xf32, #tpu.memory_space<vmem>>) attributes {dimension_semantics = [#tpu.dimension_semantics<parallel>, #tpu.dimension_semantics<parallel>], iteration_bounds = array<i64: 2, 1>, scalar_prefetch = 0 : i64, scratch_operands = 0 : i64, tpu.core_type = #tpu.core_type<tc>, window_params = [{transform_indices = @transform_0, window_bounds = array<i64: 1, 32, 64>}, {pipeline_mode = #tpu.pipeline_mode<synchronous>, transform_indices = @transform_1, window_bounds = array<i64: 32, 24>}, {pipeline_mode = #tpu.pipeline_mode<synchronous>, transform_indices = @transform_2, window_bounds = array<i64: 1, 24>}, {pipeline_mode = #tpu.pipeline_mode<synchronous>, transform_indices = @transform_3, window_bounds = array<i64: 8, 24>}, {transform_indices = @transform_4, window_bounds = array<i64: 64, 2>}, {transform_indices = @transform_5, window_bounds = array<i64: 1, 3, 64, 8>}, {transform_indices = @transform_6, window_bounds = array<i64: 1, 3, 64, 8>}]} {
    %c0 = arith.constant 0 : index
    %c0_0 = arith.constant 0 : index
    %c0_1 = arith.constant 0 : index
    %0 = vector.load %arg2[%c0, %c0_0, %c0_1] : memref<1x32x64xf32, #tpu.memory_space<vmem>>, vector<1x32x64xf32>
    %1 = vector.shape_cast %0 : vector<1x32x64xf32> to vector<32x64xf32>
    %2 = arith.truncf %1 : vector<32x64xf32> to vector<32x64xbf16>
    %c0_2 = arith.constant 0 : index
    %c0_3 = arith.constant 0 : index
    %3 = vector.load %arg3[%c0_2, %c0_3] : memref<32x24xbf16, #tpu.memory_space<vmem>>, vector<32x24xbf16>
    %cst = arith.constant dense<0.000000e+00> : vector<64x24xf32>
    %4 = tpu.matmul %2, %3, %cst {dimension_numbers = #tpu.dot_dimension_numbers<[0], [0], [1], [1], [0, 1, 1, 1], [], []>} : vector<32x64xbf16>, vector<32x24xbf16>, vector<64x24xf32> -> vector<64x24xf32>
    %c0_4 = arith.constant 0 : index
    %c0_5 = arith.constant 0 : index
    %5 = vector.load %arg4[%c0_4, %c0_5] : memref<1x24xf32, #tpu.memory_space<vmem>>, vector<1x24xf32>
    %6 = vector.broadcast %5 : vector<1x24xf32> to vector<64x24xf32>
    %7 = arith.addf %4, %6 : vector<64x24xf32>
    %8 = arith.negf %7 : vector<64x24xf32>
    %9 = math.exp %8 : vector<64x24xf32>
    %cst_6 = arith.constant 1.000000e+00 : f32
    %10 = vector.broadcast %cst_6 : f32 to vector<64x24xf32>
    %11 = arith.addf %10, %9 : vector<64x24xf32>
    %12 = arith.divf %10, %11 : vector<64x24xf32>
    %c0_7 = arith.constant 0 : index
    %c0_8 = arith.constant 0 : index
    %13 = vector.load %arg5[%c0_7, %c0_8] : memref<8x24xf32, #tpu.memory_space<vmem>>, vector<1x24xf32>
    %c1 = arith.constant 1 : index
    %c0_9 = arith.constant 0 : index
    %14 = vector.load %arg5[%c1, %c0_9] : memref<8x24xf32, #tpu.memory_space<vmem>>, vector<1x24xf32>
    %c2 = arith.constant 2 : index
    %c0_10 = arith.constant 0 : index
    %15 = vector.load %arg5[%c2, %c0_10] : memref<8x24xf32, #tpu.memory_space<vmem>>, vector<1x24xf32>
    %c3 = arith.constant 3 : index
    %c0_11 = arith.constant 0 : index
    %16 = vector.load %arg5[%c3, %c0_11] : memref<8x24xf32, #tpu.memory_space<vmem>>, vector<1x24xf32>
    %c4 = arith.constant 4 : index
    %c0_12 = arith.constant 0 : index
    %17 = vector.load %arg5[%c4, %c0_12] : memref<8x24xf32, #tpu.memory_space<vmem>>, vector<1x24xf32>
    %c0_13 = arith.constant 0 : index
    %c0_14 = arith.constant 0 : index
    %18 = vector.load %arg6[%c0_13, %c0_14] : memref<64x2xf32, #tpu.memory_space<vmem>>, vector<64x1xf32>
    %c0_15 = arith.constant 0 : index
    %c1_16 = arith.constant 1 : index
    %19 = vector.load %arg6[%c0_15, %c1_16] : memref<64x2xf32, #tpu.memory_space<vmem>>, vector<64x1xf32>
    %20 = vector.broadcast %14 : vector<1x24xf32> to vector<64x24xf32>
    %21 = arith.mulf %12, %20 : vector<64x24xf32>
    %22 = vector.broadcast %13 : vector<1x24xf32> to vector<64x24xf32>
    %23 = arith.addf %22, %21 : vector<64x24xf32>
    %24 = arith.mulf %12, %23 : vector<64x24xf32>
    %25 = vector.broadcast %18 : vector<64x1xf32> to vector<64x24xf32>
    %26 = vector.broadcast %15 : vector<1x24xf32> to vector<64x24xf32>
    %27 = arith.mulf %25, %26 : vector<64x24xf32>
    %28 = vector.broadcast %19 : vector<64x1xf32> to vector<64x24xf32>
    %29 = vector.broadcast %16 : vector<1x24xf32> to vector<64x24xf32>
    %30 = arith.mulf %28, %29 : vector<64x24xf32>
    %31 = arith.addf %27, %30 : vector<64x24xf32>
    %32 = vector.broadcast %17 : vector<1x24xf32> to vector<64x24xf32>
    %33 = arith.addf %31, %32 : vector<64x24xf32>
    %34 = arith.addf %24, %33 : vector<64x24xf32>
    %35 = vector.extract_strided_slice %7 {offsets = [0, 0], sizes = [64, 8], strides = [1, 1]} : vector<64x24xf32> to vector<64x8xf32>
    %36 = arith.truncf %35 : vector<64x8xf32> to vector<64x8xbf16>
    %c0_17 = arith.constant 0 : index
    %c0_18 = arith.constant 0 : index
    %c0_19 = arith.constant 0 : index
    %c0_20 = arith.constant 0 : index
    %37 = vector.load %arg7[%c0_17, %c0_18, %c0_19, %c0_20] : memref<1x3x64x8xbf16, #tpu.memory_space<vmem>>, vector<1x1x64x8xbf16>
    %38 = vector.shape_cast %37 : vector<1x1x64x8xbf16> to vector<64x8xbf16>
    %39 = vector.shape_cast %36 : vector<64x8xbf16> to vector<1x1x64x8xbf16>
    tpu.vector_store %arg7[%c0_17, %c0_18, %c0_19, %c0_20], %39 {strides = array<i32>} : memref<1x3x64x8xbf16, #tpu.memory_space<vmem>>, vector<1x1x64x8xbf16>,
    %40 = vector.extract_strided_slice %34 {offsets = [0, 0], sizes = [64, 8], strides = [1, 1]} : vector<64x24xf32> to vector<64x8xf32>
    %c0_21 = arith.constant 0 : index
    %c0_22 = arith.constant 0 : index
    %c0_23 = arith.constant 0 : index
    %c0_24 = arith.constant 0 : index
    %41 = vector.load %arg8[%c0_21, %c0_22, %c0_23, %c0_24] : memref<1x3x64x8xf32, #tpu.memory_space<vmem>>, vector<1x1x64x8xf32>
    %42 = vector.shape_cast %41 : vector<1x1x64x8xf32> to vector<64x8xf32>
    %43 = vector.shape_cast %40 : vector<64x8xf32> to vector<1x1x64x8xf32>
    tpu.vector_store %arg8[%c0_21, %c0_22, %c0_23, %c0_24], %43 {strides = array<i32>} : memref<1x3x64x8xf32, #tpu.memory_space<vmem>>, vector<1x1x64x8xf32>,
    %44 = vector.extract_strided_slice %7 {offsets = [0, 8], sizes = [64, 8], strides = [1, 1]} : vector<64x24xf32> to vector<64x8xf32>
    %45 = arith.truncf %44 : vector<64x8xf32> to vector<64x8xbf16>
    %c0_25 = arith.constant 0 : index
    %c1_26 = arith.constant 1 : index
    %c0_27 = arith.constant 0 : index
    %c0_28 = arith.constant 0 : index
    %46 = vector.load %arg7[%c0_25, %c1_26, %c0_27, %c0_28] : memref<1x3x64x8xbf16, #tpu.memory_space<vmem>>, vector<1x1x64x8xbf16>
    %47 = vector.shape_cast %46 : vector<1x1x64x8xbf16> to vector<64x8xbf16>
    %48 = vector.shape_cast %45 : vector<64x8xbf16> to vector<1x1x64x8xbf16>
    tpu.vector_store %arg7[%c0_25, %c1_26, %c0_27, %c0_28], %48 {strides = array<i32>} : memref<1x3x64x8xbf16, #tpu.memory_space<vmem>>, vector<1x1x64x8xbf16>,
    %49 = vector.extract_strided_slice %34 {offsets = [0, 8], sizes = [64, 8], strides = [1, 1]} : vector<64x24xf32> to vector<64x8xf32>
    %c0_29 = arith.constant 0 : index
    %c1_30 = arith.constant 1 : index
    %c0_31 = arith.constant 0 : index
    %c0_32 = arith.constant 0 : index
    %50 = vector.load %arg8[%c0_29, %c1_30, %c0_31, %c0_32] : memref<1x3x64x8xf32, #tpu.memory_space<vmem>>, vector<1x1x64x8xf32>
    %51 = vector.shape_cast %50 : vector<1x1x64x8xf32> to vector<64x8xf32>
    %52 = vector.shape_cast %49 : vector<64x8xf32> to vector<1x1x64x8xf32>
    tpu.vector_store %arg8[%c0_29, %c1_30, %c0_31, %c0_32], %52 {strides = array<i32>} : memref<1x3x64x8xf32, #tpu.memory_space<vmem>>, vector<1x1x64x8xf32>,
    %53 = vector.extract_strided_slice %7 {offsets = [0, 16], sizes = [64, 8], strides = [1, 1]} : vector<64x24xf32> to vector<64x8xf32>
    %54 = arith.truncf %53 : vector<64x8xf32> to vector<64x8xbf16>
    %c0_33 = arith.constant 0 : index
    %c2_34 = arith.constant 2 : index
    %c0_35 = arith.constant 0 : index
    %c0_36 = arith.constant 0 : index
    %55 = vector.load %arg7[%c0_33, %c2_34, %c0_35, %c0_36] : memref<1x3x64x8xbf16, #tpu.memory_space<vmem>>, vector<1x1x64x8xbf16>
    %56 = vector.shape_cast %55 : vector<1x1x64x8xbf16> to vector<64x8xbf16>
    %57 = vector.shape_cast %54 : vector<64x8xbf16> to vector<1x1x64x8xbf16>
    tpu.vector_store %arg7[%c0_33, %c2_34, %c0_35, %c0_36], %57 {strides = array<i32>} : memref<1x3x64x8xbf16, #tpu.memory_space<vmem>>, vector<1x1x64x8xbf16>,
    %58 = vector.extract_strided_slice %34 {offsets = [0, 16], sizes = [64, 8], strides = [1, 1]} : vector<64x24xf32> to vector<64x8xf32>
    %c0_37 = arith.constant 0 : index
    %c2_38 = arith.constant 2 : index
    %c0_39 = arith.constant 0 : index
    %c0_40 = arith.constant 0 : index
    %59 = vector.load %arg8[%c0_37, %c2_38, %c0_39, %c0_40] : memref<1x3x64x8xf32, #tpu.memory_space<vmem>>, vector<1x1x64x8xf32>
    %60 = vector.shape_cast %59 : vector<1x1x64x8xf32> to vector<64x8xf32>
    %61 = vector.shape_cast %58 : vector<64x8xf32> to vector<1x1x64x8xf32>
    tpu.vector_store %arg8[%c0_37, %c2_38, %c0_39, %c0_40], %61 {strides = array<i32>} : memref<1x3x64x8xf32, #tpu.memory_space<vmem>>, vector<1x1x64x8xf32>,
    return
  }
  func.func @transform_0(%arg0: i32, %arg1: i32) -> (i32, i32, i32) {
    %c0_i32 = arith.constant 0 : i32
    %c0_i32_0 = arith.constant 0 : i32
    return %arg0, %c0_i32, %arg1 : i32, i32, i32
  }
  func.func @transform_1(%arg0: i32, %arg1: i32) -> (i32, i32) {
    %c0_i32 = arith.constant 0 : i32
    %c0_i32_0 = arith.constant 0 : i32
    %c0_i32_1 = arith.constant 0 : i32
    return %c0_i32, %c0_i32_0 : i32, i32
  }
  func.func @transform_2(%arg0: i32, %arg1: i32) -> (i32, i32) {
    %c0_i32 = arith.constant 0 : i32
    %c0_i32_0 = arith.constant 0 : i32
    %c0_i32_1 = arith.constant 0 : i32
    return %c0_i32, %c0_i32_0 : i32, i32
  }
  func.func @transform_3(%arg0: i32, %arg1: i32) -> (i32, i32) {
    %c0_i32 = arith.constant 0 : i32
    %c0_i32_0 = arith.constant 0 : i32
    %c0_i32_1 = arith.constant 0 : i32
    return %c0_i32, %c0_i32_0 : i32, i32
  }
  func.func @transform_4(%arg0: i32, %arg1: i32) -> (i32, i32) {
    %c0_i32 = arith.constant 0 : i32
    %c0_i32_0 = arith.constant 0 : i32
    return %arg1, %c0_i32 : i32, i32
  }
  func.func @transform_5(%arg0: i32, %arg1: i32) -> (i32, i32, i32, i32) {
    %c0_i32 = arith.constant 0 : i32
    %c0_i32_0 = arith.constant 0 : i32
    %c0_i32_1 = arith.constant 0 : i32
    return %arg0, %c0_i32, %arg1, %c0_i32_0 : i32, i32, i32, i32
  }
  func.func @transform_6(%arg0: i32, %arg1: i32) -> (i32, i32, i32, i32) {
    %c0_i32 = arith.constant 0 : i32
    %c0_i32_0 = arith.constant 0 : i32
    %c0_i32_1 = arith.constant 0 : i32
    return %arg0, %c0_i32, %arg1, %c0_i32_0 : i32, i32, i32, i32
  }
}

</mosaic_0001>

<llo_original>
// kernel: tpu_custom_call.1
$region0: #{tpu_custom_call.1}
  #allocation0 [shape = 'u32[]', space=smem, size = 0x4, offset = 0x4, fixed_abs, tag = 'smem constant byte address 0x4 - core index']
  #allocation1 [shape = 'u32[144,128]{1,0:T(1,128)}', space=vmem, size = 0x12000, scoped, tag = 'internal scratch']
  %s0 = inlined_call_operand.vmem [shape: f32[2,32,64], index: 0, kind: input, shape index: {}]
  %s1 = inlined_call_operand.vmem [shape: bf16[32,24], index: 1, kind: input, shape index: {}]
  %s2 = inlined_call_operand.vmem [shape: f32[1,24], index: 2, kind: input, shape index: {}]
  %s3 = inlined_call_operand.vmem [shape: f32[8,24], index: 3, kind: input, shape index: {}]
  %s4 = inlined_call_operand.vmem [shape: f32[64,2], index: 4, kind: input, shape index: {}]
  %s5 = inlined_call_operand.vmem [shape: bf16[2,3,64,8], index: 5, kind: output, shape index: {0}]
  %s6 = inlined_call_operand.vmem [shape: f32[2,3,64,8], index: 6, kind: output, shape index: {1}]
  %7 = xla_tuple %s5, %s6
  %s8 = sld [smem:[#allocation0]]
  $region61: #{tpu_custom_call.1} parent=0
    _
  %s10 = ssub.s32 1, %s8
  %s11 = scalar_select 0, %s10, %s8
  loop: start=0, step=1, limit=4
  $region2: #{tpu_custom_call.1} parent=0 // loop_pre_header
    _
  $region3: #{tpu_custom_call.1} parent=0 // loop_header
    %s13 = sphi 0, %s17
    %p14 = scmp.ge.s32.totalorder %s13, 4
    %s20 = sphi 0, %s32
    %s21 = sphi 0, %s28
    %s22 = sphi 0, %s20
    %s23 = sphi 0, %s21
    %s24 = sphi 0, %s22
    %s25 = sphi 0, %s23
    %s37 = sphi 0, %s39
    %s40 = sphi 0, %s37
    %s41 = sphi 0, %s40
    %s57 = sphi 0, %s41
    %s61 = sphi 0, %s61
    %s63 = sphi 0, %s61
    %s64 = sphi 0, %s63
    %s78 = sphi 0, %s64
    %s82 = sphi 0, %s82
    %s84 = sphi 0, %s82
    %s85 = sphi 0, %s84
    %s99 = sphi 0, %s85
    %s103 = sphi 0, %s103
    %s105 = sphi 0, %s103
    %s106 = sphi 0, %s105
    %s120 = sphi 0, %s106
    %s126 = sphi 0, %s128
    %s129 = sphi 0, %s126
    %s130 = sphi 0, %s129
    %s146 = sphi 0, %s130
    %s154 = sphi 0, %s156
    %s157 = sphi 0, %s154
    %s158 = sphi 0, %s157
    %s174 = sphi 0, %s158
    %s182 = sphi 0, %s184
    %s185 = sphi 0, %s182
    %s186 = sphi 0, %s185
    %s202 = sphi 0, %s186
  $region4: #{tpu_custom_call.1} parent=0 // loop_header_branch
    %16 = sbr.rel (%p14) target = $region8
  $region5: #{tpu_custom_call.1} parent=0 // loop_body
    %s18 = ssub.s32 %s13, 1
    %s19 = ssub.s32 %s13, 2
    %s26 = sadd.s32 1, %s21
    %p27 = scmp.ge.s32.totalorder %s26, 1
    %s28 = scalar_select %p27, 0, %s26
    %s29 = sadd.s32 1, %s20
    %s30 = scalar_select %p27, %s29, %s20
    %p31 = scmp.ge.s32.totalorder %s30, 2
    %s32 = scalar_select %p31, 0, %s30
    %s33 = ssub.s32 %s20, %s32
    %s34 = ssub.s32 %s21, %s28
    %s35 = sor.u32 %s33, %s34
    %p36 = scmp.eq.s32.totalorder %s35, 0
    %s38 = sadd.s32 %s37, 1
    %s39 = scalar_select %p36, %s37, %s38
    %p42 = pneg %p36
    %p43 = scmp.eq.s32.totalorder %s13, 1
    %p44 = por %p42, %p43
    %p45 = scmp.ne.s32.totalorder %s37, %s40
    %p46 = scmp.eq.s32.totalorder %s13, 0
    %p47 = por %p45, %p46
    %p48 = scmp.ne.s32.totalorder %s37, %s40
    %p49 = scmp.eq.s32.totalorder %s18, 1
    %p50 = por %p48, %p49
    %p51 = scmp.ne.s32.totalorder %s40, %s41
    %p52 = scmp.eq.s32.totalorder %s18, 0
    %p53 = por %p51, %p52
    %p54 = scmp.ne.s32.totalorder %s40, %s41
    %p55 = scmp.eq.s32.totalorder %s19, 1
    %p56 = por %p54, %p55
    %p58 = scmp.ne.s32.totalorder %s41, %s57
    %p59 = scmp.eq.s32.totalorder %s19, 0
    %p60 = por %p58, %p59
    %s62 = sadd.s32 %s61, 1
    %p65 = scmp.eq.s32.totalorder %s13, 1
    %p66 = scmp.ne.s32.totalorder %s61, %s63
    %p67 = scmp.eq.s32.totalorder %s13, 0
    %p68 = por %p66, %p67
    %p69 = scmp.ne.s32.totalorder %s61, %s63
    %p70 = scmp.eq.s32.totalorder %s18, 1
    %p71 = por %p69, %p70
    %p72 = scmp.ne.s32.totalorder %s63, %s64
    %p73 = scmp.eq.s32.totalorder %s18, 0
    %p74 = por %p72, %p73
    %p75 = scmp.ne.s32.totalorder %s63, %s64
    %p76 = scmp.eq.s32.totalorder %s19, 1
    %p77 = por %p75, %p76
    %p79 = scmp.ne.s32.totalorder %s64, %s78
    %p80 = scmp.eq.s32.totalorder %s19, 0
    %p81 = por %p79, %p80
    %s83 = sadd.s32 %s82, 1
    %p86 = scmp.eq.s32.totalorder %s13, 1
    %p87 = scmp.ne.s32.totalorder %s82, %s84
    %p88 = scmp.eq.s32.totalorder %s13, 0
    %p89 = por %p87, %p88
    %p90 = scmp.ne.s32.totalorder %s82, %s84
    %p91 = scmp.eq.s32.totalorder %s18, 1
    %p92 = por %p90, %p91
    %p93 = scmp.ne.s32.totalorder %s84, %s85
    %p94 = scmp.eq.s32.totalorder %s18, 0
    %p95 = por %p93, %p94
    %p96 = scmp.ne.s32.totalorder %s84, %s85
    %p97 = scmp.eq.s32.totalorder %s19, 1
    %p98 = por %p96, %p97
    %p100 = scmp.ne.s32.totalorder %s85, %s99
    %p101 = scmp.eq.s32.totalorder %s19, 0
    %p102 = por %p100, %p101
    %s104 = sadd.s32 %s103, 1
    %p107 = scmp.eq.s32.totalorder %s13, 1
    %p108 = scmp.ne.s32.totalorder %s103, %s105
    %p109 = scmp.eq.s32.totalorder %s13, 0
    %p110 = por %p108, %p109
    %p111 = scmp.ne.s32.totalorder %s103, %s105
    %p112 = scmp.eq.s32.totalorder %s18, 1
    %p113 = por %p111, %p112
    %p114 = scmp.ne.s32.totalorder %s105, %s106
    %p115 = scmp.eq.s32.totalorder %s18, 0
    %p116 = por %p114, %p115
    %p117 = scmp.ne.s32.totalorder %s105, %s106
    %p118 = scmp.eq.s32.totalorder %s19, 1
    %p119 = por %p117, %p118
    %p121 = scmp.ne.s32.totalorder %s106, %s120
    %p122 = scmp.eq.s32.totalorder %s19, 0
    %p123 = por %p121, %p122
    %s124 = ssub.s32 %s21, %s28
    %p125 = scmp.eq.s32.totalorder %s124, 0
    %s127 = sadd.s32 %s126, 1
    %s128 = scalar_select %p125, %s126, %s127
    %p131 = pneg %p125
    %p132 = scmp.eq.s32.totalorder %s13, 1
    %p133 = por %p131, %p132
    %p134 = scmp.ne.s32.totalorder %s126, %s129
    %p135 = scmp.eq.s32.totalorder %s13, 0
    %p136 = por %p134, %p135
    %p137 = scmp.ne.s32.totalorder %s126, %s129
    %p138 = scmp.eq.s32.totalorder %s18, 1
    %p139 = por %p137, %p138
    %p140 = scmp.ne.s32.totalorder %s129, %s130
    %p141 = scmp.eq.s32.totalorder %s18, 0
    %p142 = por %p140, %p141
    %p143 = scmp.ne.s32.totalorder %s129, %s130
    %p144 = scmp.eq.s32.totalorder %s19, 1
    %p145 = por %p143, %p144
    %p147 = scmp.ne.s32.totalorder %s130, %s146
    %p148 = scmp.eq.s32.totalorder %s19, 0
    %p149 = por %p147, %p148
    %s150 = ssub.s32 %s20, %s32
    %s151 = ssub.s32 %s21, %s28
    %s152 = sor.u32 %s150, %s151
    %p153 = scmp.eq.s32.totalorder %s152, 0
    %s155 = sadd.s32 %s154, 1
    %s156 = scalar_select %p153, %s154, %s155
    %p159 = pneg %p153
    %p160 = scmp.eq.s32.totalorder %s13, 1
    %p161 = por %p159, %p160
    %p162 = scmp.ne.s32.totalorder %s154, %s157
    %p163 = scmp.eq.s32.totalorder %s13, 0
    %p164 = por %p162, %p163
    %p165 = scmp.ne.s32.totalorder %s154, %s157
    %p166 = scmp.eq.s32.totalorder %s18, 1
    %p167 = por %p165, %p166
    %p168 = scmp.ne.s32.totalorder %s157, %s158
    %p169 = scmp.eq.s32.totalorder %s18, 0
    %p170 = por %p168, %p169
    %p171 = scmp.ne.s32.totalorder %s157, %s158
    %p172 = scmp.eq.s32.totalorder %s19, 1
    %p173 = por %p171, %p172
    %p175 = scmp.ne.s32.totalorder %s158, %s174
    %p176 = scmp.eq.s32.totalorder %s19, 0
    %p177 = por %p175, %p176
    %s178 = ssub.s32 %s20, %s32
    %s179 = ssub.s32 %s21, %s28
    %s180 = sor.u32 %s178, %s179
    %p181 = scmp.eq.s32.totalorder %s180, 0
    %s183 = sadd.s32 %s182, 1
    %s184 = scalar_select %p181, %s182, %s183
    %p187 = pneg %p181
    %p188 = scmp.eq.s32.totalorder %s13, 1
    %p189 = por %p187, %p188
    %p190 = scmp.ne.s32.totalorder %s182, %s185
    %p191 = scmp.eq.s32.totalorder %s13, 0
    %p192 = por %p190, %p191
    %p193 = scmp.ne.s32.totalorder %s182, %s185
    %p194 = scmp.eq.s32.totalorder %s18, 1
    %p195 = por %p193, %p194
    %p196 = scmp.ne.s32.totalorder %s185, %s186
    %p197 = scmp.eq.s32.totalorder %s18, 0
    %p198 = por %p196, %p197
    %p199 = scmp.ne.s32.totalorder %s185, %s186
    %p200 = scmp.eq.s32.totalorder %s19, 1
    %p201 = por %p199, %p200
    %p203 = scmp.ne.s32.totalorder %s186, %s202
    %p204 = scmp.eq.s32.totalorder %s19, 0
    %p205 = por %p203, %p204
    %p206 = scmp.le.s32.totalorder 1, %s13
    %p207 = scmp.lt.s32.totalorder %s13, 3
    %p208 = pnand %p206, %p207
    %p209 = pneg %p208
    // Predicated region
    $region9: #{tpu_custom_call.1} parent=5 // pred_check
      _
    $region10: #{tpu_custom_call.1} parent=5 // pred_check_branch
      %211 = sbr.rel (%p208) target = $region12
    $region11: #{tpu_custom_call.1} parent=5 // pred_region
      %s212 = ssub.s32 %s13, 1
      // Predicated region
      $region13: #{tpu_custom_call.1} parent=11 // pred_check
        %p213 = pneg %p74
      $region14: #{tpu_custom_call.1} parent=11 // pred_check_branch
        %215 = sbr.rel (%p213) target = $region16
      $region15: #{tpu_custom_call.1} parent=11 // pred_region
        _
      $region16: #{tpu_custom_call.1} parent=11 // pred_fallthru
        _
      // Predicated region
      $region17: #{tpu_custom_call.1} parent=11 // pred_check
        %p216 = pneg %p95
      $region18: #{tpu_custom_call.1} parent=11 // pred_check_branch
        %218 = sbr.rel (%p216) target = $region20
      $region19: #{tpu_custom_call.1} parent=11 // pred_region
        _
      $region20: #{tpu_custom_call.1} parent=11 // pred_fallthru
        _
      // Predicated region
      $region21: #{tpu_custom_call.1} parent=11 // pred_check
        %p219 = pneg %p116
      $region22: #{tpu_custom_call.1} parent=11 // pred_check_branch
        %221 = sbr.rel (%p219) target = $region24
      $region23: #{tpu_custom_call.1} parent=11 // pred_region
        _
      $region24: #{tpu_custom_call.1} parent=11 // pred_fallthru
        _
      // Predicated region
      $region25: #{tpu_custom_call.1} parent=11 // pred_check
        %p222 = pneg %p142
      $region26: #{tpu_custom_call.1} parent=11 // pred_check_branch
        %224 = sbr.rel (%p222) target = $region28
      $region27: #{tpu_custom_call.1} parent=11 // pred_region
        %s225 = smul.u32 8, %s23
        %p226 = scmp.lt.s32.totalorder %s225, 7
        %s227 = scalar_select %p226, %s225, 7
        %s228 = smul.addr %s227, 8
        %s229 = scalar_lea.vmem %s4, %s228
        %s230 = smul.u32 8, %s23
      $region28: #{tpu_custom_call.1} parent=11 // pred_fallthru
        _
    $region12: #{tpu_custom_call.1} parent=5 // pred_fallthru
      _
    %p231 = scmp.lt.s32.totalorder %s13, 2
    // Predicated region
    $region29: #{tpu_custom_call.1} parent=5 // pred_check
      %p232 = pneg %p231
    $region30: #{tpu_custom_call.1} parent=5 // pred_check_branch
      %234 = sbr.rel (%p232) target = $region32
    $region31: #{tpu_custom_call.1} parent=5 // pred_region
      // Predicated region
      $region33: #{tpu_custom_call.1} parent=31 // pred_check
        %p235 = pneg %p47
      $region34: #{tpu_custom_call.1} parent=31 // pred_check_branch
        %237 = sbr.rel (%p235) target = $region36
      $region35: #{tpu_custom_call.1} parent=31 // pred_region
        %p238 = scmp.lt.s32.totalorder %s20, 1
        %s239 = scalar_select %p238, %s20, 1
        %p240 = scmp.lt.s32.totalorder %s21, 0
        %s241 = scalar_select %p240, %s21, 0
        %s242 = smul.addr %s239, 4
        %s243 = sadd.s32 %s241, %s242
        %s244 = smul.addr %s243, 8
        %s245 = scalar_lea.vmem %s0, %s244
      $region36: #{tpu_custom_call.1} parent=31 // pred_fallthru
        _
    $region32: #{tpu_custom_call.1} parent=5 // pred_fallthru
      _
    %p246 = scmp.le.s32.totalorder 1, %s13
    %p247 = scmp.lt.s32.totalorder %s13, 3
    %p248 = pnand %p246, %p247
    %p249 = pneg %p248
    // Predicated region
    $region37: #{tpu_custom_call.1} parent=5 // pred_check
      _
    $region38: #{tpu_custom_call.1} parent=5 // pred_check_branch
      %251 = sbr.rel (%p248) target = $region40
    $region39: #{tpu_custom_call.1} parent=5 // pred_region
      %s252 = ssub.s32 %s13, 1
      %p253 = scmp.lt.s32.totalorder %s22, 1
      %s254 = scalar_select %p253, %s22, 1
      %p255 = scmp.lt.s32.totalorder %s23, 0
      %s256 = scalar_select %p255, %s23, 0
      %s257 = smul.addr %s254, 4
      %s258 = sadd.s32 %s256, %s257
      %s259 = smul.addr %s258, 8
      %s260 = scalar_lea.vmem %s0, %s259
      %p261 = pneg %p53
      %p262 = pneg %p50
      %p263 = pneg %p74
      %p264 = pneg %p71
      %p265 = pneg %p95
      %p266 = pneg %p92
      %p267 = pneg %p116
      %p268 = pneg %p113
      %s269 = smul.u32 8, %s23
      %p270 = scmp.lt.s32.totalorder %s269, 7
      %s271 = scalar_select %p270, %s269, 7
      %s272 = smul.addr %s271, 8
      %s273 = scalar_lea.vmem %s4, %s272
      %p274 = pneg %p142
      %p275 = pneg %p139
      %p276 = pneg %p170
      %p277 = pneg %p167
      %s278 = smul.u32 8, %s23
      %p279 = scmp.lt.s32.totalorder %s22, 1
      %s280 = scalar_select %p279, %s22, 1
      %p281 = scmp.lt.s32.totalorder %s278, 7
      %s282 = scalar_select %p281, %s278, 7
      %s283 = smul.addr %s280, 24
      %s284 = sadd.s32 %s282, %s283
      %s285 = smul.addr %s284, 4
      %s286 = scalar_lea.vmem %s5, %s285
      %p287 = pneg %p198
      %p288 = pneg %p195
      %s289 = smul.u32 8, %s23
      %p290 = scmp.lt.s32.totalorder %s22, 1
      %s291 = scalar_select %p290, %s22, 1
      %p292 = scmp.lt.s32.totalorder %s289, 7
      %s293 = scalar_select %p292, %s289, 7
      %s294 = smul.addr %s291, 24
      %s295 = sadd.s32 %s293, %s294
      %s296 = smul.addr %s295, 8
      %s297 = scalar_lea.vmem %s6, %s296
      %p298 = scmp.lt.s32.totalorder %s22, 1
      %s299 = scalar_select %p298, %s22, 1
      %p300 = scmp.lt.s32.totalorder %s23, 0
      %s301 = scalar_select %p300, %s23, 0
      %s302 = smul.addr %s299, 4
      %s303 = sadd.s32 %s301, %s302
      %s304 = smul.addr %s303, 8
      %s305 = scalar_lea.vmem %s0, %s304
      %s306 = smul.u32 8, %s23
      %p307 = scmp.lt.s32.totalorder %s306, 7
      %s308 = scalar_select %p307, %s306, 7
      %s309 = smul.addr %s308, 8
      %s310 = scalar_lea.vmem %s4, %s309
      %s311 = smul.u32 8, %s23
      %s312 = smul.u32 8, %s23
      %p313 = scmp.lt.s32.totalorder %s22, 1
      %s314 = scalar_select %p313, %s22, 1
      %p315 = scmp.lt.s32.totalorder %s312, 7
      %s316 = scalar_select %p315, %s312, 7
      %s317 = smul.addr %s314, 24
      %s318 = sadd.s32 %s316, %s317
      %s319 = smul.addr %s318, 4
      %s320 = scalar_lea.vmem %s5, %s319
      %s321 = smul.u32 8, %s23
      %s322 = smul.u32 8, %s23
      %p323 = scmp.lt.s32.totalorder %s22, 1
      %s324 = scalar_select %p323, %s22, 1
      %p325 = scmp.lt.s32.totalorder %s322, 7
      %s326 = scalar_select %p325, %s322, 7
      %s327 = smul.addr %s324, 24
      %s328 = sadd.s32 %s326, %s327
      %s329 = smul.addr %s328, 8
      %s330 = scalar_lea.vmem %s6, %s329
      %s331 = smul.u32 8, %s23
      %v333 = vld [vmem:[%s305] sm:$0xff]
      %v334 = vld [vmem:[%s305 + $0x8] sm:$0xff]
      %v335 = vld [vmem:[%s305 + $0x10] sm:$0xff]
      %v336 = vld [vmem:[%s305 + $0x18] sm:$0xff]
      %v337 = vpack.c.bf16 %v334, %v333
      %v338 = vpack.c.bf16 %v336, %v335
      %v339 = vld [vmem:[%s1] sm:$0xf]
      %v340 = vld [vmem:[%s1 + $0x4] sm:$0xf]
      %v341 = vld [vmem:[%s1 + $0x8] sm:$0xf]
      %v342 = vld [vmem:[%s1 + $0xc] sm:$0xf]
      %v343 = vld [vmem:[%s2] sm:$0x1]
      %v345 = vlaneseq
      %v346 = vshrl.u32 %v345, 7
      %v347 = vsub.s32 0, %v346
      %v348 = vrot.slane %v343, %v347
      %350 = vxpose.xlu0.c.b16.start [1/8] %v337, 128
      %351 = vxpose.xlu0.c.b16.cont [2/8] %v338, 128
      %352 = vxpose.xlu0.c.b16.cont [3/8] 0, 128
      %353 = vxpose.xlu0.c.b16.cont [4/8] 0, 128
      %354 = vxpose.xlu0.c.b16.cont [5/8] 0, 128
      %355 = vxpose.xlu0.c.b16.cont [6/8] 0, 128
      %356 = vxpose.xlu0.c.b16.cont [7/8] 0, 128
      %357 = vxpose.xlu0.c.b16.end [8/8] 0, 128
      %v358 = vpop.trf.xlu0
      %v359 = vpop.trf.xlu0
      %v360 = vpop.trf.xlu0
      %v361 = vpop.trf.xlu0
      %v362 = vpop.trf.xlu0
      %v363 = vpop.trf.xlu0
      %v364 = vpop.trf.xlu0
      %v365 = vpop.trf.xlu0
      %v370 = vunpack.c.l.b16 %v339
      %v371 = vunpack.c.l.b16 %v340
      %v372 = vunpack.c.l.b16 %v341
      %v373 = vunpack.c.l.b16 %v342
      %v374 = vpack.c.b16 %v371, %v370
      %v375 = vpack.c.b16 %v373, %v372
      %vm378 = vcmask 261120
      %v380 = vsel %vm378, %v358, 0
      %v383 = vsel %vm378, %v359, 0
      %v386 = vsel %vm378, %v360, 0
      %v389 = vsel %vm378, %v361, 0
      %391 = vmatprep.subr.bf16.mxu0 0
      %392 = vmatpush1.bf16.msra.mxu0 0
      %393 = vmatprep.subr.bf16.mxu0 0
      %394 = vmatpush1.bf16.msra.mxu0 0
      %395 = vmatprep.subr.bf16.mxu0 0
      %396 = vmatpush1.bf16.msra.mxu0 0
      %397 = vmatprep.subr.bf16.mxu0 0
      %398 = vmatpush1.bf16.msra.mxu0 0
      %399 = vmatprep.subr.bf16.mxu0 0
      %400 = vmatpush1.bf16.msra.mxu0 0
      %401 = vmatprep.subr.bf16.mxu0 0
      %402 = vmatpush1.bf16.msra.mxu0 0
      %403 = vmatprep.subr.bf16.mxu0 0
      %404 = vmatpush1.bf16.msra.mxu0 %v375
      %405 = vmatprep.subr.bf16.mxu0 0
      %406 = vmatpush1.bf16.msra.mxu0 %v374
      %407 = vmatprep.subr.bf16.mxu0 0
      %408 = vmatpush2.bf16.msra.mxu0 0
      %409 = vmatprep.subr.bf16.mxu0 0
      %410 = vmatpush2.bf16.msra.mxu0 0
      %411 = vmatprep.subr.bf16.mxu0 0
      %412 = vmatpush2.bf16.msra.mxu0 0
      %413 = vmatprep.subr.bf16.mxu0 0
      %414 = vmatpush2.bf16.msra.mxu0 0
      %415 = vmatprep.subr.bf16.mxu0 0
      %416 = vmatpush2.bf16.msra.mxu0 0
      %417 = vmatprep.subr.bf16.mxu0 0
      %418 = vmatpush2.bf16.msra.mxu0 0
      %419 = vmatprep.subr.bf16.mxu0 0
      %420 = vmatpush2.bf16.msra.mxu0 0
      %421 = vmatprep.subr.bf16.mxu0 0
      %422 = vmatpush2.bf16.msra.mxu0 0
      %423 = vmatprep.mubr.bf16.mxu0 0
      %424 = vmatmul.mubr.bf16.gmra.mxu0 %v380
      %v425 = vpop.f32.mrf.mxu0
      %v426 = vadd.f32 %v348, %v425
      %v427 = vpop.f32.mrf.mxu0
      %v428 = vpop.f32.mrf.mxu0
      %v429 = vadd.f32 %v348, %v428
      %v430 = vpop.f32.mrf.mxu0
      %431 = vmatprep.mubr.bf16.mxu0 0
      %432 = vmatmul.mubr.bf16.gmra.mxu0 %v383
      %v433 = vpop.f32.mrf.mxu0
      %v434 = vadd.f32 %v348, %v433
      %v435 = vpop.f32.mrf.mxu0
      %v436 = vpop.f32.mrf.mxu0
      %v437 = vadd.f32 %v348, %v436
      %v438 = vpop.f32.mrf.mxu0
      %439 = vmatprep.mubr.bf16.mxu0 0
      %440 = vmatmul.mubr.bf16.gmra.mxu0 %v386
      %v441 = vpop.f32.mrf.mxu0
      %v442 = vadd.f32 %v348, %v441
      %v443 = vpop.f32.mrf.mxu0
      %v444 = vpop.f32.mrf.mxu0
      %v445 = vadd.f32 %v348, %v444
      %v446 = vpop.f32.mrf.mxu0
      %447 = vmatprep.mubr.bf16.mxu0 0
      %448 = vmatmul.mubr.bf16.gmra.mxu0 %v389
      %v449 = vpop.f32.mrf.mxu0
      %v450 = vadd.f32 %v348, %v449
      %v451 = vpop.f32.mrf.mxu0
      %v452 = vpop.f32.mrf.mxu0
      %v453 = vadd.f32 %v348, %v452
      %v454 = vpop.f32.mrf.mxu0
      %455 = vdwg.mxu0
      %v456 = vxor.u32 %v426, 2147483648
      %v457 = vxor.u32 %v429, 2147483648
      %v458 = vxor.u32 %v434, 2147483648
      %v459 = vxor.u32 %v437, 2147483648
      %v460 = vxor.u32 %v442, 2147483648
      %v461 = vxor.u32 %v445, 2147483648
      %v462 = vxor.u32 %v450, 2147483648
      %v463 = vxor.u32 %v453, 2147483648
      %v464 = vmul.f32 %v456, 1.442695
      %v465 = vpow.pop %v464
      %v466 = vmul.f32 %v457, 1.442695
      %v467 = vpow.pop %v466
      %v468 = vmul.f32 %v458, 1.442695
      %v469 = vpow.pop %v468
      %v470 = vmul.f32 %v459, 1.442695
      %v471 = vpow.pop %v470
      %v472 = vmul.f32 %v460, 1.442695
      %v473 = vpow.pop %v472
      %v474 = vmul.f32 %v461, 1.442695
      %v475 = vpow.pop %v474
      %v476 = vmul.f32 %v462, 1.442695
      %v477 = vpow.pop %v476
      %v478 = vmul.f32 %v463, 1.442695
      %v479 = vpow.pop %v478
      %v480 = vadd.f32 %v465, 1.0
      %v481 = vadd.f32 %v467, 1.0
      %v482 = vadd.f32 %v469, 1.0
      %v483 = vadd.f32 %v471, 1.0
      %v484 = vadd.f32 %v473, 1.0
      %v485 = vadd.f32 %v475, 1.0
      %v486 = vadd.f32 %v477, 1.0
      %v487 = vadd.f32 %v479, 1.0
      %v488 = vrcp.pop %v480
      %v489 = vmul.f32 1.0, %v488
      %v490 = vrcp.pop %v481
      %v491 = vmul.f32 1.0, %v490
      %v492 = vrcp.pop %v482
      %v493 = vmul.f32 1.0, %v492
      %v494 = vrcp.pop %v483
      %v495 = vmul.f32 1.0, %v494
      %v496 = vrcp.pop %v484
      %v497 = vmul.f32 1.0, %v496
      %v498 = vrcp.pop %v485
      %v499 = vmul.f32 1.0, %v498
      %v500 = vrcp.pop %v486
      %v501 = vmul.f32 1.0, %v500
      %v502 = vrcp.pop %v487
      %v503 = vmul.f32 1.0, %v502
      %v504 = vld [vmem:[%s3] sm:$0x1]
      %v505 = vld [vmem:[%s3 + $0x1] sm:$0x1]
      %v506 = vld [vmem:[%s3 + $0x2] sm:$0x1]
      %v507 = vld [vmem:[%s3 + $0x3] sm:$0x1]
      %v508 = vld [vmem:[%s3 + $0x4] sm:$0x1]
      %v509 = vld [vmem:[%s310] sm:$0xff]
      %v510 = vld [vmem:[%s310 + $0x8] sm:$0xff]
      %v511 = vld [vmem:[%s310 + $0x10] sm:$0xff]
      %v512 = vld [vmem:[%s310 + $0x18] sm:$0xff]
      %v513 = vld [vmem:[%s310 + $0x20] sm:$0xff]
      %v514 = vld [vmem:[%s310 + $0x28] sm:$0xff]
      %v515 = vld [vmem:[%s310 + $0x30] sm:$0xff]
      %v516 = vld [vmem:[%s310 + $0x38] sm:$0xff]
      %v517 = vlaneseq
      %v518 = vshrl.u32 %v517, 7
      %v519 = vsub.s32 0, %v518
      %v520 = vrot.slane %v505, %v519
      %v521 = vmul.f32 %v489, %v520
      %v522 = vmul.f32 %v491, %v520
      %v523 = vmul.f32 %v493, %v520
      %v524 = vmul.f32 %v495, %v520
      %v525 = vmul.f32 %v497, %v520
      %v526 = vmul.f32 %v499, %v520
      %v527 = vmul.f32 %v501, %v520
      %v528 = vmul.f32 %v503, %v520
      %v529 = vlaneseq
      %v530 = vshrl.u32 %v529, 7
      %v531 = vsub.s32 0, %v530
      %v532 = vrot.slane %v504, %v531
      %v533 = vadd.f32 %v532, %v521
      %v534 = vadd.f32 %v532, %v522
      %v535 = vadd.f32 %v532, %v523
      %v536 = vadd.f32 %v532, %v524
      %v537 = vadd.f32 %v532, %v525
      %v538 = vadd.f32 %v532, %v526
      %v539 = vadd.f32 %v532, %v527
      %v540 = vadd.f32 %v532, %v528
      %v541 = vmul.f32 %v489, %v533
      %v542 = vmul.f32 %v491, %v534
      %v543 = vmul.f32 %v493, %v535
      %v544 = vmul.f32 %v495, %v536
      %v545 = vmul.f32 %v497, %v537
      %v546 = vmul.f32 %v499, %v538
      %v547 = vmul.f32 %v501, %v539
      %v548 = vmul.f32 %v503, %v540
      %550 = vset.pattern.permute.xlu0 0
      %551 = vperm.xlu0 %550, %v509
      %v552 = vpop.permute.xlu0 %551
      %555 = vset.pattern.permute.xlu0 0
      %556 = vperm.xlu0 %555, %v510
      %v557 = vpop.permute.xlu0 %556
      %560 = vset.pattern.permute.xlu0 0
      %561 = vperm.xlu0 %560, %v511
      %v562 = vpop.permute.xlu0 %561
      %565 = vset.pattern.permute.xlu0 0
      %566 = vperm.xlu0 %565, %v512
      %v567 = vpop.permute.xlu0 %566
      %570 = vset.pattern.permute.xlu0 0
      %571 = vperm.xlu0 %570, %v513
      %v572 = vpop.permute.xlu0 %571
      %575 = vset.pattern.permute.xlu0 0
      %576 = vperm.xlu0 %575, %v514
      %v577 = vpop.permute.xlu0 %576
      %580 = vset.pattern.permute.xlu0 0
      %581 = vperm.xlu0 %580, %v515
      %v582 = vpop.permute.xlu0 %581
      %585 = vset.pattern.permute.xlu0 0
      %586 = vperm.xlu0 %585, %v516
      %v587 = vpop.permute.xlu0 %586
      %v589 = vlaneseq
      %v590 = vshrl.u32 %v589, 7
      %v591 = vsub.s32 0, %v590
      %v592 = vrot.slane %v506, %v591
      %v593 = vmul.f32 %v552, %v592
      %v594 = vmul.f32 %v557, %v592
      %v595 = vmul.f32 %v562, %v592
      %v596 = vmul.f32 %v567, %v592
      %v597 = vmul.f32 %v572, %v592
      %v598 = vmul.f32 %v577, %v592
      %v599 = vmul.f32 %v582, %v592
      %v600 = vmul.f32 %v587, %v592
      %601 = vset.pattern.permute.xlu0 1
      %602 = vperm.xlu0 %601, %v509
      %v603 = vpop.permute.xlu0 %602
      %605 = vset.pattern.permute.xlu0 1
      %606 = vperm.xlu0 %605, %v510
      %v607 = vpop.permute.xlu0 %606
      %609 = vset.pattern.permute.xlu0 1
      %610 = vperm.xlu0 %609, %v511
      %v611 = vpop.permute.xlu0 %610
      %613 = vset.pattern.permute.xlu0 1
      %614 = vperm.xlu0 %613, %v512
      %v615 = vpop.permute.xlu0 %614
      %617 = vset.pattern.permute.xlu0 1
      %618 = vperm.xlu0 %617, %v513
      %v619 = vpop.permute.xlu0 %618
      %621 = vset.pattern.permute.xlu0 1
      %622 = vperm.xlu0 %621, %v514
      %v623 = vpop.permute.xlu0 %622
      %625 = vset.pattern.permute.xlu0 1
      %626 = vperm.xlu0 %625, %v515
      %v627 = vpop.permute.xlu0 %626
      %629 = vset.pattern.permute.xlu0 1
      %630 = vperm.xlu0 %629, %v516
      %v631 = vpop.permute.xlu0 %630
      %v633 = vlaneseq
      %v634 = vshrl.u32 %v633, 7
      %v635 = vsub.s32 0, %v634
      %v636 = vrot.slane %v507, %v635
      %v637 = vmul.f32 %v603, %v636
      %v638 = vmul.f32 %v607, %v636
      %v639 = vmul.f32 %v611, %v636
      %v640 = vmul.f32 %v615, %v636
      %v641 = vmul.f32 %v619, %v636
      %v642 = vmul.f32 %v623, %v636
      %v643 = vmul.f32 %v627, %v636
      %v644 = vmul.f32 %v631, %v636
      %v645 = vadd.f32 %v593, %v637
      %v646 = vadd.f32 %v594, %v638
      %v647 = vadd.f32 %v595, %v639
      %v648 = vadd.f32 %v596, %v640
      %v649 = vadd.f32 %v597, %v641
      %v650 = vadd.f32 %v598, %v642
      %v651 = vadd.f32 %v599, %v643
      %v652 = vadd.f32 %v600, %v644
      %v653 = vlaneseq
      %v654 = vshrl.u32 %v653, 7
      %v655 = vsub.s32 0, %v654
      %v656 = vrot.slane %v508, %v655
      %v657 = vadd.f32 %v645, %v656
      %v658 = vadd.f32 %v646, %v656
      %v659 = vadd.f32 %v647, %v656
      %v660 = vadd.f32 %v648, %v656
      %v661 = vadd.f32 %v649, %v656
      %v662 = vadd.f32 %v650, %v656
      %v663 = vadd.f32 %v651, %v656
      %v664 = vadd.f32 %v652, %v656
      %v665 = vadd.f32 %v541, %v657
      %v666 = vadd.f32 %v542, %v658
      %v667 = vadd.f32 %v543, %v659
      %v668 = vadd.f32 %v544, %v660
      %v669 = vadd.f32 %v545, %v661
      %v670 = vadd.f32 %v546, %v662
      %v671 = vadd.f32 %v547, %v663
      %v672 = vadd.f32 %v548, %v664
      %v673 = vpack.c.bf16 %v429, %v426
      %v674 = vpack.c.bf16 %v437, %v434
      %v675 = vpack.c.bf16 %v445, %v442
      %v676 = vpack.c.bf16 %v453, %v450
      %v681 = vunpack.c.l.b16 %v673
      %v682 = vunpack.c.h.b16 %v673
      %v683 = vunpack.c.l.b16 %v674
      %v684 = vunpack.c.h.b16 %v674
      %v685 = vunpack.c.l.b16 %v675
      %v686 = vunpack.c.h.b16 %v675
      %v687 = vunpack.c.l.b16 %v676
      %v688 = vunpack.c.h.b16 %v676
      %v689 = vpack.c.b16 %v681, %v681
      %v690 = vpack.c.b16 %v682, %v682
      %v691 = vpack.c.b16 %v683, %v683
      %v692 = vpack.c.b16 %v684, %v684
      %v693 = vpack.c.b16 %v685, %v685
      %v694 = vpack.c.b16 %v686, %v686
      %v695 = vpack.c.b16 %v687, %v687
      %v696 = vpack.c.b16 %v688, %v688
      %vm705 = vcmask 60416
      %706 = vst.msk [vmem:[%s320] sm:$0xf] %vm705, %v689
      %707 = vst.msk [vmem:[%s320 + $0x4] sm:$0xf] %vm705, %v690
      %708 = vst.msk [vmem:[%s320 + $0x8] sm:$0xf] %vm705, %v691
      %709 = vst.msk [vmem:[%s320 + $0xc] sm:$0xf] %vm705, %v692
      %710 = vst.msk [vmem:[%s320 + $0x10] sm:$0xf] %vm705, %v693
      %711 = vst.msk [vmem:[%s320 + $0x14] sm:$0xf] %vm705, %v694
      %712 = vst.msk [vmem:[%s320 + $0x18] sm:$0xf] %vm705, %v695
      %713 = vst.msk [vmem:[%s320 + $0x1c] sm:$0xf] %vm705, %v696
      %vm714 = vcmask 64512
      %715 = vst.msk [vmem:[%s330] sm:$0xff] %vm714, %v665
      %716 = vst.msk [vmem:[%s330 + $0x8] sm:$0xff] %vm714, %v666
      %717 = vst.msk [vmem:[%s330 + $0x10] sm:$0xff] %vm714, %v667
      %718 = vst.msk [vmem:[%s330 + $0x18] sm:$0xff] %vm714, %v668
      %719 = vst.msk [vmem:[%s330 + $0x20] sm:$0xff] %vm714, %v669
      %720 = vst.msk [vmem:[%s330 + $0x28] sm:$0xff] %vm714, %v670
      %721 = vst.msk [vmem:[%s330 + $0x30] sm:$0xff] %vm714, %v671
      %722 = vst.msk [vmem:[%s330 + $0x38] sm:$0xff] %vm714, %v672
      %723 = vrot.lane.b32.xlu0 %v689, 120
      %v724 = vpop.permute.xlu0 %723
      %725 = vrot.lane.b32.xlu0 %v690, 120
      %v726 = vpop.permute.xlu0 %725
      %727 = vrot.lane.b32.xlu0 %v691, 120
      %v728 = vpop.permute.xlu0 %727
      %729 = vrot.lane.b32.xlu0 %v692, 120
      %v730 = vpop.permute.xlu0 %729
      %731 = vrot.lane.b32.xlu0 %v693, 120
      %v732 = vpop.permute.xlu0 %731
      %733 = vrot.lane.b32.xlu0 %v694, 120
      %v734 = vpop.permute.xlu0 %733
      %735 = vrot.lane.b32.xlu0 %v695, 120
      %v736 = vpop.permute.xlu0 %735
      %737 = vrot.lane.b32.xlu0 %v696, 120
      %v738 = vpop.permute.xlu0 %737
      %s747 = scalar_lea.vmem %s320, 32
      %748 = vst.msk [vmem:[%s747] sm:$0xf] %vm705, %v724
      %749 = vst.msk [vmem:[%s747 + $0x4] sm:$0xf] %vm705, %v726
      %750 = vst.msk [vmem:[%s747 + $0x8] sm:$0xf] %vm705, %v728
      %751 = vst.msk [vmem:[%s747 + $0xc] sm:$0xf] %vm705, %v730
      %752 = vst.msk [vmem:[%s747 + $0x10] sm:$0xf] %vm705, %v732
      %753 = vst.msk [vmem:[%s747 + $0x14] sm:$0xf] %vm705, %v734
      %754 = vst.msk [vmem:[%s747 + $0x18] sm:$0xf] %vm705, %v736
      %755 = vst.msk [vmem:[%s747 + $0x1c] sm:$0xf] %vm705, %v738
      %764 = vrot.lane.b32.xlu0 %v665, 120
      %v765 = vpop.permute.xlu0 %764
      %766 = vrot.lane.b32.xlu0 %v666, 120
      %v767 = vpop.permute.xlu0 %766
      %768 = vrot.lane.b32.xlu0 %v667, 120
      %v769 = vpop.permute.xlu0 %768
      %770 = vrot.lane.b32.xlu0 %v668, 120
      %v771 = vpop.permute.xlu0 %770
      %772 = vrot.lane.b32.xlu0 %v669, 120
      %v773 = vpop.permute.xlu0 %772
      %774 = vrot.lane.b32.xlu0 %v670, 120
      %v775 = vpop.permute.xlu0 %774
      %776 = vrot.lane.b32.xlu0 %v671, 120
      %v777 = vpop.permute.xlu0 %776
      %778 = vrot.lane.b32.xlu0 %v672, 120
      %v779 = vpop.permute.xlu0 %778
      %s788 = scalar_lea.vmem %s330, 64
      %789 = vst.msk [vmem:[%s788] sm:$0xff] %vm714, %v765
      %790 = vst.msk [vmem:[%s788 + $0x8] sm:$0xff] %vm714, %v767
      %791 = vst.msk [vmem:[%s788 + $0x10] sm:$0xff] %vm714, %v769
      %792 = vst.msk [vmem:[%s788 + $0x18] sm:$0xff] %vm714, %v771
      %793 = vst.msk [vmem:[%s788 + $0x20] sm:$0xff] %vm714, %v773
      %794 = vst.msk [vmem:[%s788 + $0x28] sm:$0xff] %vm714, %v775
      %795 = vst.msk [vmem:[%s788 + $0x30] sm:$0xff] %vm714, %v777
      %796 = vst.msk [vmem:[%s788 + $0x38] sm:$0xff] %vm714, %v779
      %797 = vrot.lane.b32.xlu0 %v689, 112
      %v798 = vpop.permute.xlu0 %797
      %799 = vrot.lane.b32.xlu0 %v690, 112
      %v800 = vpop.permute.xlu0 %799
      %801 = vrot.lane.b32.xlu0 %v691, 112
      %v802 = vpop.permute.xlu0 %801
      %803 = vrot.lane.b32.xlu0 %v692, 112
      %v804 = vpop.permute.xlu0 %803
      %805 = vrot.lane.b32.xlu0 %v693, 112
      %v806 = vpop.permute.xlu0 %805
      %807 = vrot.lane.b32.xlu0 %v694, 112
      %v808 = vpop.permute.xlu0 %807
      %809 = vrot.lane.b32.xlu0 %v695, 112
      %v810 = vpop.permute.xlu0 %809
      %811 = vrot.lane.b32.xlu0 %v696, 112
      %v812 = vpop.permute.xlu0 %811
      %s821 = scalar_lea.vmem %s320, 64
      %822 = vst.msk [vmem:[%s821] sm:$0xf] %vm705, %v798
      %823 = vst.msk [vmem:[%s821 + $0x4] sm:$0xf] %vm705, %v800
      %824 = vst.msk [vmem:[%s821 + $0x8] sm:$0xf] %vm705, %v802
      %825 = vst.msk [vmem:[%s821 + $0xc] sm:$0xf] %vm705, %v804
      %826 = vst.msk [vmem:[%s821 + $0x10] sm:$0xf] %vm705, %v806
      %827 = vst.msk [vmem:[%s821 + $0x14] sm:$0xf] %vm705, %v808
      %828 = vst.msk [vmem:[%s821 + $0x18] sm:$0xf] %vm705, %v810
      %829 = vst.msk [vmem:[%s821 + $0x1c] sm:$0xf] %vm705, %v812
      %830 = vrot.lane.b32.xlu0 %v665, 112
      %v831 = vpop.permute.xlu0 %830
      %832 = vrot.lane.b32.xlu0 %v666, 112
      %v833 = vpop.permute.xlu0 %832
      %834 = vrot.lane.b32.xlu0 %v667, 112
      %v835 = vpop.permute.xlu0 %834
      %836 = vrot.lane.b32.xlu0 %v668, 112
      %v837 = vpop.permute.xlu0 %836
      %838 = vrot.lane.b32.xlu0 %v669, 112
      %v839 = vpop.permute.xlu0 %838
      %840 = vrot.lane.b32.xlu0 %v670, 112
      %v841 = vpop.permute.xlu0 %840
      %842 = vrot.lane.b32.xlu0 %v671, 112
      %v843 = vpop.permute.xlu0 %842
      %844 = vrot.lane.b32.xlu0 %v672, 112
      %v845 = vpop.permute.xlu0 %844
      %s854 = scalar_lea.vmem %s330, 128
      %855 = vst.msk [vmem:[%s854] sm:$0xff] %vm714, %v831
      %856 = vst.msk [vmem:[%s854 + $0x8] sm:$0xff] %vm714, %v833
      %857 = vst.msk [vmem:[%s854 + $0x10] sm:$0xff] %vm714, %v835
      %858 = vst.msk [vmem:[%s854 + $0x18] sm:$0xff] %vm714, %v837
      %859 = vst.msk [vmem:[%s854 + $0x20] sm:$0xff] %vm714, %v839
      %860 = vst.msk [vmem:[%s854 + $0x28] sm:$0xff] %vm714, %v841
      %861 = vst.msk [vmem:[%s854 + $0x30] sm:$0xff] %vm714, %v843
      %862 = vst.msk [vmem:[%s854 + $0x38] sm:$0xff] %vm714, %v845
      %s863 = smul.u32 8, %s23
      %p864 = scmp.lt.s32.totalorder %s22, 1
      %s865 = scalar_select %p864, %s22, 1
      %p866 = scmp.lt.s32.totalorder %s863, 7
      %s867 = scalar_select %p866, %s863, 7
      %s868 = smul.addr %s865, 24
      %s869 = sadd.s32 %s867, %s868
      %s870 = smul.addr %s869, 4
      %s871 = scalar_lea.vmem %s5, %s870
      %s872 = smul.u32 8, %s23
      %p873 = scmp.lt.s32.totalorder %s22, 1
      %s874 = scalar_select %p873, %s22, 1
      %p875 = scmp.lt.s32.totalorder %s872, 7
      %s876 = scalar_select %p875, %s872, 7
      %s877 = smul.addr %s874, 24
      %s878 = sadd.s32 %s876, %s877
      %s879 = smul.addr %s878, 8
      %s880 = scalar_lea.vmem %s6, %s879
      // Predicated region
      $region41: #{tpu_custom_call.1} parent=39 // pred_check
        %p881 = pneg %p167
      $region42: #{tpu_custom_call.1} parent=39 // pred_check_branch
        %883 = sbr.rel (%p881) target = $region44
      $region43: #{tpu_custom_call.1} parent=39 // pred_region
        %s884 = smul.u32 8, %s23
      $region44: #{tpu_custom_call.1} parent=39 // pred_fallthru
        _
      // Predicated region
      $region45: #{tpu_custom_call.1} parent=39 // pred_check
        %p885 = pneg %p195
      $region46: #{tpu_custom_call.1} parent=39 // pred_check_branch
        %887 = sbr.rel (%p885) target = $region48
      $region47: #{tpu_custom_call.1} parent=39 // pred_region
        %s888 = smul.u32 8, %s23
      $region48: #{tpu_custom_call.1} parent=39 // pred_fallthru
        _
    $region40: #{tpu_custom_call.1} parent=5 // pred_fallthru
      _
    %p889 = scmp.le.s32.totalorder 2, %s13
    // Predicated region
    $region49: #{tpu_custom_call.1} parent=5 // pred_check
      %p890 = pneg %p889
    $region50: #{tpu_custom_call.1} parent=5 // pred_check_branch
      %892 = sbr.rel (%p890) target = $region52
    $region51: #{tpu_custom_call.1} parent=5 // pred_region
      %s893 = ssub.s32 %s13, 2
      // Predicated region
      $region53: #{tpu_custom_call.1} parent=51 // pred_check
        %p894 = pneg %p173
      $region54: #{tpu_custom_call.1} parent=51 // pred_check_branch
        %896 = sbr.rel (%p894) target = $region56
      $region55: #{tpu_custom_call.1} parent=51 // pred_region
        %s897 = smul.u32 8, %s25
        %p898 = scmp.lt.s32.totalorder %s24, 1
        %s899 = scalar_select %p898, %s24, 1
        %p900 = scmp.lt.s32.totalorder %s897, 7
        %s901 = scalar_select %p900, %s897, 7
        %s902 = smul.addr %s899, 24
        %s903 = sadd.s32 %s901, %s902
        %s904 = smul.addr %s903, 4
        %s905 = scalar_lea.vmem %s5, %s904
      $region56: #{tpu_custom_call.1} parent=51 // pred_fallthru
        _
      // Predicated region
      $region57: #{tpu_custom_call.1} parent=51 // pred_check
        %p906 = pneg %p201
      $region58: #{tpu_custom_call.1} parent=51 // pred_check_branch
        %908 = sbr.rel (%p906) target = $region60
      $region59: #{tpu_custom_call.1} parent=51 // pred_region
        %s909 = smul.u32 8, %s25
        %p910 = scmp.lt.s32.totalorder %s24, 1
        %s911 = scalar_select %p910, %s24, 1
        %p912 = scmp.lt.s32.totalorder %s909, 7
        %s913 = scalar_select %p912, %s909, 7
        %s914 = smul.addr %s911, 24
        %s915 = sadd.s32 %s913, %s914
        %s916 = smul.addr %s915, 8
        %s917 = scalar_lea.vmem %s6, %s916
      $region60: #{tpu_custom_call.1} parent=51 // pred_fallthru
        _
    $region52: #{tpu_custom_call.1} parent=5 // pred_fallthru
      _
  $region6: #{tpu_custom_call.1} parent=0 // loop_footer
    %s17 = sadd.s32 1, %s13
  $region7: #{tpu_custom_call.1} parent=0 // loop_footer_branch
    %12 = sbr.rel target = $region3
  $region8: #{tpu_custom_call.1} parent=0 // loop_exit
    _

</llo_original>
